<compile_context>
chip_gen: v5e
topology: v5e:2x2
jax: 0.10.0
libtpu: 0.0.40
codegen_flags: <defaults>
</compile_context>

<pallas_src>
import math
import functools

import jax
import jax.numpy as jnp
from jax import lax
from jax.experimental import pallas as pl
from jax.experimental.pallas import tpu as pltpu

NEG_INF = -1e30  # finite "minus infinity": avoids inf-inf NaN for fully-masked rows


# ----------------------------------------------------------------------------
# small tiling helpers
# ----------------------------------------------------------------------------
def _round_up(n, m):
    return ((n + m - 1) // m) * m


def _tile_and_pad(n, cap):
    """(tile, padded_n): tile | padded_n; tile is a multiple of 8 (of 128 when
    the axis is actually tiled, since the caps are 128/256/512)."""
    if n <= cap:
        t = _round_up(n, 8)
        return t, t
    return cap, _round_up(n, cap)


def _lane_tile(n, cap):
    """Tile for a lane (minor) dim: a multiple of 128 dividing n, else the full n."""
    if n <= cap:
        return n
    t = (cap // 128) * 128
    while t >= 128:
        if n % t == 0:
            return t
        t -= 128
    return n


def _sublane_tile(n, cap):
    """Tile for a sublane (2nd-minor) dim: a multiple of 8 dividing n, else full n."""
    if n <= cap:
        return n
    t = (cap // 8) * 8
    while t >= 8:
        if n % t == 0:
            return t
        t -= 8
    return n


def _vmem_capacity_bytes():
    try:
        return int(pltpu.get_tpu_info().vmem_capacity_bytes)
    except Exception:
        return 64 << 20  # conservative (v7x per-TensorCore)


# ----------------------------------------------------------------------------
# Stage 1: fused QKV projection   y = x @ [Wq*s | Wk | Wv] + [bq*s | bk | bv]
# ----------------------------------------------------------------------------
def qkv_proj_kernel(x_ref, w_ref, b_ref, o_ref, acc_ref):
    k = pl.program_id(2)

    @pl.when(k == 0)
    def _():
        acc_ref[...] = jnp.zeros_like(acc_ref)

    acc_ref[...] += jnp.dot(x_ref[...], w_ref[...],
                            preferred_element_type=jnp.float32)

    @pl.when(k == pl.num_programs(2) - 1)
    def _():
        o_ref[...] = (acc_ref[...] + b_ref[...]).astype(o_ref.dtype)


def _qkv_projection(x2, w_qkv, b_qkv, *, compute_dtype, vmem_cap):
    """x2: (M, dim) bf16; w_qkv: (dim, 3*dim) bf16; b_qkv: (1, 3*dim) f32."""
    M, dim = x2.shape
    N = w_qkv.shape[1]
    tm = _sublane_tile(M, 256)
    tn = _lane_tile(N, 512)
    tkp = _lane_tile(dim, 512)

    isz = jnp.dtype(compute_dtype).itemsize
    need = (2 * (tm * tkp * isz + tkp * tn * isz + tn * 4 + tm * tn * isz)
            + tm * tn * 4)
    vmem_limit = int(min(0.92 * vmem_cap, max(32 << 20, 1.25 * need + (2 << 20))))

    grid = (M // tm, N // tn, dim // tkp)
    return pl.pallas_call(
        qkv_proj_kernel,
        out_shape=jax.ShapeDtypeStruct((M, N), compute_dtype),
        grid_spec=pltpu.PrefetchScalarGridSpec(
            num_scalar_prefetch=0,
            grid=grid,
            in_specs=[
                pl.BlockSpec((tm, tkp), lambda i, j, k: (i, k)),   # x tile
                pl.BlockSpec((tkp, tn), lambda i, j, k: (k, j)),   # W tile
                pl.BlockSpec((1, tn),   lambda i, j, k: (0, j)),   # bias tile
            ],
            out_specs=pl.BlockSpec((tm, tn), lambda i, j, k: (i, j)),
            scratch_shapes=[pltpu.VMEM((tm, tn), jnp.float32)]),
        compiler_params=pltpu.CompilerParams(
            dimension_semantics=("parallel", "parallel", "arbitrary"),
            vmem_limit_bytes=vmem_limit),
    )(x2, w_qkv, b_qkv)


# ----------------------------------------------------------------------------
# Stage 2: flash attention + (head-merge folded) output projection
# ----------------------------------------------------------------------------
def mha_flash_kernel(q_ref, k_ref, v_ref, bias_ref, wo_ref, bo_ref,
                     o_ref,
                     m_scr, l_scr, acc_scr, out_scr,
                     *, wo_resident):
    """One grid step = (batch b, query tile qi, head h, kv tile kt)."""
    h = pl.program_id(2)
    kt = pl.program_id(3)
    cdt = v_ref.dtype                               # bf16 compute dtype

    # Zero the per-(b, q-tile) output-projection accumulator once.
    @pl.when((h == 0) & (kt == 0))
    def _():
        out_scr[...] = jnp.zeros_like(out_scr)

    # New head: reset the online-softmax state.
    @pl.when(kt == 0)
    def _():
        m_scr[...] = jnp.full(m_scr.shape, NEG_INF, jnp.float32)
        l_scr[...] = jnp.zeros_like(l_scr)
        acc_scr[...] = jnp.zeros_like(acc_scr)

    q = q_ref[...]                                  # (tq, Dh) bf16, pre-scaled
    k = k_ref[...]                                  # (tk, Dh) bf16
    v = v_ref[...]                                  # (tk, Dh) bf16

    # scores (tq, tk): contract the head dim (no explicit transpose).
    s = lax.dot_general(q, k, (((1,), (1,)), ((), ())),
                        preferred_element_type=jnp.float32)
    s = s + bias_ref[...]                           # additive bias, (1, tk) bcast

    # Online-softmax update (all f32).
    m_prev = m_scr[...]
    m_new = jnp.maximum(m_prev, jnp.max(s, axis=-1, keepdims=True))
    alpha = jnp.exp(m_prev - m_new)
    p = jnp.exp(s - m_new)
    l_scr[...] = alpha * l_scr[...] + jnp.sum(p, axis=-1, keepdims=True)
    acc_scr[...] = alpha * acc_scr[...] + jnp.dot(
        p.astype(cdt), v, preferred_element_type=jnp.float32)
    m_scr[...] = m_new

    # Head finished: normalize context, fold the head merge into the out-proj.
    @pl.when(kt == pl.num_programs(3) - 1)
    def _():
        ctx = acc_scr[...] * pl.reciprocal(l_scr[...], approx=True)   # (tq, Dh)
        w_o = wo_ref[h] if wo_resident else wo_ref[0]                 # (Dh, dim)
        out_scr[...] += jnp.dot(ctx.astype(cdt), w_o,
                                preferred_element_type=jnp.float32)   # (tq, dim)

        @pl.when(h == pl.num_programs(2) - 1)
        def _():
            o_ref[...] = (out_scr[...] + bo_ref[...]).astype(o_ref.dtype)


def multi_head_attention(x, mask, params, *, n_heads, compute_dtype=jnp.bfloat16):
    """x: (bs, qlen, dim); mask: (bs, klen) with 0 = masked. Self-attention path.

    Projection weights are stored as (in, out) so y = x @ W + b (== nn.Linear)."""
    bs, qlen, dim = x.shape
    assert mask.ndim == 2, "only the 2-D (bs, klen) padding mask is implemented"
    klen = mask.shape[1]
    assert klen == qlen, "self-attention path: klen == qlen"
    assert dim % n_heads == 0
    dph = dim // n_heads
    scale = 1.0 / math.sqrt(dph)

    wq, bq = params['q']
    wk, bk = params['k']
    wv, bv = params['v']
    wo, bo = params['o']

    cdt = compute_dtype
    isz = jnp.dtype(cdt).itemsize
    osz = jnp.dtype(x.dtype).itemsize

    # ---- generation-aware tile caps & VMEM budget ---------------------------
    try:
        kind = jax.devices()[0].device_kind.lower()
    except Exception:
        kind = ""
    old_gen = any(g in kind for g in ("v2", "v3", "v4", "v5"))   # 128-wide MXU
    tq_cap, tk_cap = (128, 256) if old_gen else (256, 512)

    vmem_cap = _vmem_capacity_bytes()
    budget = int(0.80 * vmem_cap)

    # Keep the full (dim, dim) out-projection weight resident in VMEM unless it
    # would eat too much of the budget (then stream per-head blocks instead).
    wo_resident = (2 * dim * dim * isz) <= max(budget // 4, 8 << 20)

    def flash_vmem(tq_, tk_):
        blk = 2 * (tq_ * dph * isz          # q block
                   + 2 * tk_ * dph * isz    # k, v blocks
                   + tk_ * 4                # bias
                   + dim * 4                # bo
                   + tq_ * dim * osz)       # output block
        wo_b = 2 * (dim * dim if wo_resident else dph * dim) * isz
        scr = 2 * tq_ * 4 + tq_ * dph * 4 + tq_ * dim * 4
        return blk + wo_b + scr

    while True:
        tq, qlen_p = _tile_and_pad(qlen, tq_cap)
        tk, klen_p = _tile_and_pad(klen, tk_cap)
        if flash_vmem(tq, tk) <= budget or (tq_cap <= 128 and tk_cap <= 128):
            break
        if tk_cap > 128:
            tk_cap //= 2
        else:
            tq_cap //= 2

    # ---- Stage 1: fused QKV projection (scale folded into Wq / bq) ----------
    w_qkv = jnp.concatenate([wq * scale, wk, wv], axis=1).astype(cdt)   # (dim, 3*dim)
    b_qkv = jnp.concatenate([bq * scale, bk, bv]).reshape(1, 3 * dim
                                                          ).astype(jnp.float32)

    x_p = x
    if qlen_p > qlen:
        x_p = jnp.pad(x, ((0, 0), (0, qlen_p - qlen), (0, 0)))
    x2 = x_p.reshape(bs * qlen_p, dim).astype(cdt)

    qkv = _qkv_projection(x2, w_qkv, b_qkv, compute_dtype=cdt,
                          vmem_cap=vmem_cap)                 # (bs*qlen_p, 3*dim)
    qkv = qkv.reshape(bs, qlen_p, 3, n_heads, dph)
    q_h = qkv[:, :, 0].transpose(0, 2, 1, 3)                 # (bs, H, qlen_p, Dh)
    k_h = qkv[:, :, 1].transpose(0, 2, 1, 3)
    v_h = qkv[:, :, 2].transpose(0, 2, 1, 3)
    if klen_p > qlen_p:
        pad = ((0, 0), (0, 0), (0, klen_p - qlen_p), (0, 0))
        k_h = jnp.pad(k_h, pad)
        v_h = jnp.pad(v_h, pad)
    elif klen_p < qlen_p:
        k_h = k_h[:, :, :klen_p]
        v_h = v_h[:, :, :klen_p]

    # Additive mask bias precomputed host-side; padded key positions are masked.
    bias = jnp.where(mask == 0, jnp.float32(NEG_INF), jnp.float32(0.0))
    if klen_p > klen:
        bias = jnp.pad(bias, ((0, 0), (0, klen_p - klen)),
                       constant_values=NEG_INF)

    wo_h = wo.reshape(n_heads, dph, dim).astype(cdt)         # (H, Dh, dim)
    bo_r = bo.reshape(1, dim).astype(jnp.float32)

    # ---- Stage 2: flash attention ------------------------------------------
    nq, nkt = qlen_p // tq, klen_p // tk
    grid = (bs, nq, n_heads, nkt)

    if wo_resident:
        wo_spec = pl.BlockSpec((n_heads, dph, dim), lambda b, qi, h, kt: (0, 0, 0))
    else:
        wo_spec = pl.BlockSpec((1, dph, dim), lambda b, qi, h, kt: (h, 0, 0))

    kernel = functools.partial(mha_flash_kernel, wo_resident=wo_resident)
    vmem_limit = int(min(0.92 * vmem_cap,
                         max(32 << 20, 1.25 * flash_vmem(tq, tk) + (2 << 20))))

    out_p = pl.pallas_call(
        kernel,
        out_shape=jax.ShapeDtypeStruct((bs, qlen_p, dim), x.dtype),
        grid_spec=pltpu.PrefetchScalarGridSpec(
            num_scalar_prefetch=0,
            grid=grid,
            in_specs=[
                pl.BlockSpec((None, None, tq, dph),
                             lambda b, qi, h, kt: (b, h, qi, 0)),      # Q tile
                pl.BlockSpec((None, None, tk, dph),
                             lambda b, qi, h, kt: (b, h, kt, 0)),      # K tile
                pl.BlockSpec((None, None, tk, dph),
                             lambda b, qi, h, kt: (b, h, kt, 0)),      # V tile
                pl.BlockSpec((1, tk), lambda b, qi, h, kt: (b, kt)),   # mask bias
                wo_spec,                                               # Wo
                pl.BlockSpec((1, dim), lambda b, qi, h, kt: (0, 0)),   # bo
            ],
            out_specs=pl.BlockSpec((None, tq, dim),
                                   lambda b, qi, h, kt: (b, qi, 0)),
            scratch_shapes=[
                pltpu.VMEM((tq, 1), jnp.float32),       # running max m
                pltpu.VMEM((tq, 1), jnp.float32),       # running denom l
                pltpu.VMEM((tq, dph), jnp.float32),     # unnormalized context acc
                pltpu.VMEM((tq, dim), jnp.float32),     # output-projection acc
            ]),
        compiler_params=pltpu.CompilerParams(
            dimension_semantics=("parallel", "parallel", "arbitrary", "arbitrary"),
            vmem_limit_bytes=vmem_limit),
    )(q_h, k_h, v_h, bias, wo_h, bo_r)

    return out_p[:, :qlen] if qlen_p > qlen else out_p


# ----------------------------------------------------------------------------
# Pure-JAX f32 reference mirroring the PyTorch forward (eval mode)
# ----------------------------------------------------------------------------
def reference_mha(x, mask, params, *, n_heads):
    bs, qlen, dim = x.shape
    dph = dim // n_heads

    def lin(t, w, b):   # w is (in, out)
        return t @ w + b

    def shape(t):
        return t.reshape(bs, -1, n_heads, dph).transpose(0, 2, 1, 3)

    q = shape(lin(x, *params['q'])) / math.sqrt(dph)
    k = shape(lin(x, *params['k']))
    v = shape(lin(x, *params['v']))
    scores = jnp.einsum('bhqd,bhkd->bhqk', q, k)
    scores = jnp.where((mask == 0)[:, None, None, :], -jnp.inf, scores)
    weights = jax.nn.softmax(scores, axis=-1)
    ctx = jnp.einsum('bhqk,bhkd->bhqd', weights, v)
    ctx = ctx.transpose(0, 2, 1, 3).reshape(bs, qlen, dim)
    return lin(ctx, *params['o'])


if __name__ == "__main__":
    bs, qlen, dim, n_heads = 2, 8, 32, 4
    key = jax.random.PRNGKey(0)
    keys = jax.random.split(key, 10)

    # nn.Linear-like uniform init; weights stored as (in, out).
    bound = 1.0 / math.sqrt(dim)

    def init_linear(kw, kb):
        w = jax.random.uniform(kw, (dim, dim), jnp.float32, -bound, bound)
        b = jax.random.uniform(kb, (dim,), jnp.float32, -bound, bound)
        return w, b

    params = {
        'q': init_linear(keys[0], keys[1]),
        'k': init_linear(keys[2], keys[3]),
        'v': init_linear(keys[4], keys[5]),
        'o': init_linear(keys[6], keys[7]),
    }

    x = jax.random.normal(keys[8], (bs, qlen, dim), jnp.float32)
    # padding mask: batch 0 attends to all 8 positions, batch 1 to the first 5
    lengths = jnp.array([qlen, 5])
    mask = (jnp.arange(qlen)[None, :] < lengths[:, None]).astype(jnp.float32)

    out = multi_head_attention(x, mask, params, n_heads=n_heads)
    out = jax.block_until_ready(out)

    ref = reference_mha(x, mask, params, n_heads=n_heads)
    assert out.shape == (bs, qlen, dim)
    # bf16 MXU compute with f32 accumulation -> bf16-level tolerance vs f32 ref.
    assert jnp.allclose(out, ref, atol=3e-2, rtol=3e-2), "mismatch vs reference"

    print("KERNEL_OK")
</pallas_src>

<mosaic_0001>
module attributes {stable_mosaic.version = 11 : i64} {
  func.func @qkv_proj_kernel(%arg0: i32, %arg1: i32, %arg2: i32, %arg3: memref<16x32xbf16, #tpu.memory_space<vmem>>, %arg4: memref<32x96xbf16, #tpu.memory_space<vmem>>, %arg5: memref<1x96xf32, #tpu.memory_space<vmem>>, %arg6: memref<16x96xbf16, #tpu.memory_space<vmem>>, %arg7: memref<16x96xf32, #tpu.memory_space<vmem>>) attributes {dimension_semantics = [#tpu.dimension_semantics<parallel>, #tpu.dimension_semantics<parallel>, #tpu.dimension_semantics<arbitrary>], iteration_bounds = array<i64: 1, 1, 1>, scalar_prefetch = 0 : i64, scratch_operands = 1 : i64, tpu.core_type = #tpu.core_type<tc>, window_params = [{transform_indices = @transform_0, window_bounds = array<i64: 16, 32>}, {transform_indices = @transform_1, window_bounds = array<i64: 32, 96>}, {transform_indices = @transform_2, window_bounds = array<i64: 1, 96>}, {transform_indices = @transform_3, window_bounds = array<i64: 16, 96>}]} {
    %c0_i32 = arith.constant 0 : i32
    %0 = arith.cmpi eq, %arg2, %c0_i32 : i32
    %1 = arith.extui %0 : i1 to i32
    %c0_i32_0 = arith.constant 0 : i32
    %2 = arith.cmpi ne, %1, %c0_i32_0 : i32
    scf.if %2 {
      %cst_10 = arith.constant 0.000000e+00 : f32
      %12 = vector.broadcast %cst_10 : f32 to vector<16x96xf32>
      %c0_11 = arith.constant 0 : index
      %c0_12 = arith.constant 0 : index
      %13 = vector.load %arg7[%c0_11, %c0_12] : memref<16x96xf32, #tpu.memory_space<vmem>>, vector<16x96xf32>
      tpu.vector_store %arg7[%c0_11, %c0_12], %12 {strides = array<i32>} : memref<16x96xf32, #tpu.memory_space<vmem>>, vector<16x96xf32>,
    } else {
    }
    %c0 = arith.constant 0 : index
    %c0_1 = arith.constant 0 : index
    %3 = vector.load %arg7[%c0, %c0_1] : memref<16x96xf32, #tpu.memory_space<vmem>>, vector<16x96xf32>
    %c0_2 = arith.constant 0 : index
    %c0_3 = arith.constant 0 : index
    %4 = vector.load %arg3[%c0_2, %c0_3] : memref<16x32xbf16, #tpu.memory_space<vmem>>, vector<16x32xbf16>
    %c0_4 = arith.constant 0 : index
    %c0_5 = arith.constant 0 : index
    %5 = vector.load %arg4[%c0_4, %c0_5] : memref<32x96xbf16, #tpu.memory_space<vmem>>, vector<32x96xbf16>
    %cst = arith.constant dense<0.000000e+00> : vector<16x96xf32>
    %6 = tpu.matmul %4, %5, %cst {dimension_numbers = #tpu.dot_dimension_numbers<[1], [0], [0], [1], [0, 0, 1, 1], [], []>} : vector<16x32xbf16>, vector<32x96xbf16>, vector<16x96xf32> -> vector<16x96xf32>
    %7 = arith.addf %3, %6 : vector<16x96xf32>
    %c0_6 = arith.constant 0 : index
    %c0_7 = arith.constant 0 : index
    %8 = vector.load %arg7[%c0_6, %c0_7] : memref<16x96xf32, #tpu.memory_space<vmem>>, vector<16x96xf32>
    tpu.vector_store %arg7[%c0_6, %c0_7], %7 {strides = array<i32>} : memref<16x96xf32, #tpu.memory_space<vmem>>, vector<16x96xf32>,
    %c0_i32_8 = arith.constant 0 : i32
    %9 = arith.cmpi eq, %arg2, %c0_i32_8 : i32
    %10 = arith.extui %9 : i1 to i32
    %c0_i32_9 = arith.constant 0 : i32
    %11 = arith.cmpi ne, %10, %c0_i32_9 : i32
    scf.if %11 {
      %c0_10 = arith.constant 0 : index
      %c0_11 = arith.constant 0 : index
      %12 = vector.load %arg7[%c0_10, %c0_11] : memref<16x96xf32, #tpu.memory_space<vmem>>, vector<16x96xf32>
      %c0_12 = arith.constant 0 : index
      %c0_13 = arith.constant 0 : index
      %13 = vector.load %arg5[%c0_12, %c0_13] : memref<1x96xf32, #tpu.memory_space<vmem>>, vector<1x96xf32>
      %14 = vector.broadcast %13 : vector<1x96xf32> to vector<16x96xf32>
      %15 = arith.addf %12, %14 : vector<16x96xf32>
      %16 = arith.truncf %15 : vector<16x96xf32> to vector<16x96xbf16>
      %c0_14 = arith.constant 0 : index
      %c0_15 = arith.constant 0 : index
      %17 = vector.load %arg6[%c0_14, %c0_15] : memref<16x96xbf16, #tpu.memory_space<vmem>>, vector<16x96xbf16>
      tpu.vector_store %arg6[%c0_14, %c0_15], %16 {strides = array<i32>} : memref<16x96xbf16, #tpu.memory_space<vmem>>, vector<16x96xbf16>,
    } else {
    }
    return
  }
  func.func @transform_0(%arg0: i32, %arg1: i32, %arg2: i32) -> (i32, i32) {
    %c0_i32 = arith.constant 0 : i32
    return %arg0, %arg2 : i32, i32
  }
  func.func @transform_1(%arg0: i32, %arg1: i32, %arg2: i32) -> (i32, i32) {
    %c0_i32 = arith.constant 0 : i32
    return %arg2, %arg1 : i32, i32
  }
  func.func @transform_2(%arg0: i32, %arg1: i32, %arg2: i32) -> (i32, i32) {
    %c0_i32 = arith.constant 0 : i32
    %c0_i32_0 = arith.constant 0 : i32
    return %c0_i32, %arg1 : i32, i32
  }
  func.func @transform_3(%arg0: i32, %arg1: i32, %arg2: i32) -> (i32, i32) {
    %c0_i32 = arith.constant 0 : i32
    return %arg0, %arg1 : i32, i32
  }
}

</mosaic_0001>

<llo_original>
// kernel: tpu_custom_call.1
$region0: #{tpu_custom_call.1}
  #allocation0 [shape = 'u32[]', space=smem, size = 0x4, offset = 0x4, fixed_abs, tag = 'smem constant byte address 0x4 - core index']
  #allocation1 [shape = 'u32[72,128]{1,0:T(1,128)}', space=vmem, size = 0x9000, scoped, tag = 'internal scratch']
  #allocation2 [shape = 'f32[16,96]{1,0:T(8,128)}', space=vmem, size = 0x2000, scoped, tag = 'scratch operand']
  %s0 = inlined_call_operand.hbm [shape: bf16[16,32], index: 0, kind: input, shape index: {}]
  %s1 = inlined_call_operand.hbm [shape: bf16[32,96], index: 1, kind: input, shape index: {}]
  %s2 = inlined_call_operand.vmem [shape: f32[1,96], index: 2, kind: input, shape index: {}]
  %s3 = inlined_call_operand.hbm [shape: bf16[16,96], index: 3, kind: output, shape index: {}]
  %s4 = sld [smem:[#allocation0]]
  $region38: #{tpu_custom_call.1} parent=0
    _
  %s6 = ssub.s32 1, %s4
  %s7 = scalar_select 0, %s6, %s4
  $region1: #{tpu_custom_call.1} parent=0
    #allocation3 [shape = 'u8[4096]{0}', space=vmem, size = 0x1000, scoped, tag = 'input window, operand 0, single buffered']
    #allocation4 [shape = 's32[1]{0}', space=sflag, size = 0x4, scoped, tag = 'scoped memory for tpu_custom_call.1']
    #allocation5 [shape = 's32[1]{0}', space=sflag, size = 0x4, scoped, tag = 'scoped memory for tpu_custom_call.1']
    #allocation6 [shape = 'u8[8192]{0}', space=vmem, size = 0x2000, scoped, tag = 'input window, operand 1, single buffered']
    #allocation7 [shape = 's32[1]{0}', space=sflag, size = 0x4, scoped, tag = 'scoped memory for tpu_custom_call.1']
    #allocation8 [shape = 'u8[4096]{0}', space=vmem, size = 0x1000, scoped, tag = 'output window, operand 0, single buffered']
    %8 = vsyncpa [#allocation4], 0
    %9 = vsyncpa [#allocation7], 0
    %10 = vsyncpa [#allocation5], 0
    // Predicated region
    $region2: #{tpu_custom_call.1} parent=1 // pred_check
      _
    $region3: #{tpu_custom_call.1} parent=1 // pred_check_branch
      %12 = sbr.rel (0) target = $region5
    $region4: #{tpu_custom_call.1} parent=1 // pred_region
      %14 = vsyncadd [#allocation4], 0
      %s15 = sshll.u32 %s0, 4
      %s16 = int_to_ptr.hbm [resolvable:$true] %s15
      %s17 = sshll.u32 [#allocation3], 4
      %s18 = int_to_ptr.vmem [resolvable:$true] %s17
      %23 = dma.hbm_to_vmem [thread:$0]  %s16, 128, %s18, [#allocation4], 64, 64, 4
    $region5: #{tpu_custom_call.1} parent=1 // pred_fallthru
      _
    // Predicated region
    $region6: #{tpu_custom_call.1} parent=1 // pred_check
      _
    $region7: #{tpu_custom_call.1} parent=1 // pred_check_branch
      %25 = sbr.rel (0) target = $region9
    $region8: #{tpu_custom_call.1} parent=1 // pred_region
      %27 = vsyncadd [#allocation7], 0
      %s28 = sshll.u32 %s1, 4
      %s29 = int_to_ptr.hbm [resolvable:$true] %s28
      %s30 = sshll.u32 [#allocation6], 4
      %s31 = int_to_ptr.vmem [resolvable:$true] %s30
      %36 = dma.hbm_to_vmem [thread:$0]  %s29, 256, %s31, [#allocation7], 64, 64, 4
    $region9: #{tpu_custom_call.1} parent=1 // pred_fallthru
      _
    // Predicated region
    $region10: #{tpu_custom_call.1} parent=1 // pred_check
      _
    $region11: #{tpu_custom_call.1} parent=1 // pred_check_branch
      %38 = sbr.rel (0) target = $region13
    $region12: #{tpu_custom_call.1} parent=1 // pred_region
      _
    $region13: #{tpu_custom_call.1} parent=1 // pred_fallthru
      _
    // Predicated region
    $region14: #{tpu_custom_call.1} parent=1 // pred_check
      _
    $region15: #{tpu_custom_call.1} parent=1 // pred_check_branch
      %40 = sbr.rel (0) target = $region17
    $region16: #{tpu_custom_call.1} parent=1 // pred_region
      %42 = dma.done [#allocation4], 128
    $region17: #{tpu_custom_call.1} parent=1 // pred_fallthru
      _
    // Predicated region
    $region18: #{tpu_custom_call.1} parent=1 // pred_check
      _
    $region19: #{tpu_custom_call.1} parent=1 // pred_check_branch
      %44 = sbr.rel (0) target = $region21
    $region20: #{tpu_custom_call.1} parent=1 // pred_region
      %46 = dma.done [#allocation7], 256
    $region21: #{tpu_custom_call.1} parent=1 // pred_fallthru
      _
    %p48 = scmp.eq.s32.totalorder 0, 0
    // Predicated region
    $region22: #{tpu_custom_call.1} parent=1 // pred_check
      %p49 = pneg %p48
    $region23: #{tpu_custom_call.1} parent=1 // pred_check_branch
      %51 = sbr.rel (%p49) target = $region25
    $region24: #{tpu_custom_call.1} parent=1 // pred_region
      %vm52 = vcmask 785408
      %53 = vst.msk [vmem:[#allocation2] sm:$0xff] %vm52, 0.0
      %54 = vst.msk [vmem:[#allocation2 + $0x8] sm:$0xff] %vm52, 0.0
    $region25: #{tpu_custom_call.1} parent=1 // pred_fallthru
      _
    %v55 = vld [vmem:[#allocation2] sm:$0xff]
    %v56 = vld [vmem:[#allocation2 + $0x8] sm:$0xff]
    %v57 = vld [vmem:[#allocation3] sm:$0xf]
    %v58 = vld [vmem:[#allocation3 + $0x4] sm:$0xf]
    %v59 = vld [vmem:[#allocation6] sm:$0xf]
    %v60 = vld [vmem:[#allocation6 + $0x4] sm:$0xf]
    %v61 = vld [vmem:[#allocation6 + $0x8] sm:$0xf]
    %v62 = vld [vmem:[#allocation6 + $0xc] sm:$0xf]
    %v65 = vunpack.c.l.b16 %v57
    %v66 = vunpack.c.l.b16 %v58
    %v67 = vpack.c.b16 %v66, %v65
    %v72 = vunpack.c.l.b16 %v59
    %v73 = vunpack.c.l.b16 %v60
    %v74 = vunpack.c.l.b16 %v61
    %v75 = vunpack.c.l.b16 %v62
    %v76 = vpack.c.b16 %v73, %v72
    %v77 = vpack.c.b16 %v75, %v74
    %vm80 = vcmask 261120
    %v82 = vsel %vm80, %v67, 0
    %84 = vmatpush.bf16.msra.mxu0 0
    %85 = vmatpush.bf16.msra.mxu0 0
    %86 = vmatpush.bf16.msra.mxu0 0
    %87 = vmatpush.bf16.msra.mxu0 0
    %88 = vmatpush.bf16.msra.mxu0 0
    %89 = vmatpush.bf16.msra.mxu0 0
    %90 = vmatpush.bf16.msra.mxu0 %v77
    %91 = vmatpush.bf16.msra.mxu0 %v76
    %92 = vmatmul.bf16.gmra.mxu0 %v82
    %v93 = vpop.f32.mrf.mxu0
    %v94 = vadd.f32 0.0, %v93
    %v95 = vpop.f32.mrf.mxu0
    %v96 = vadd.f32 0.0, %v95
    %97 = vdwg.mxu0
    %v98 = vadd.f32 %v55, %v94
    %v99 = vadd.f32 %v56, %v96
    %vm100 = vcmask 785408
    %101 = vst.msk [vmem:[#allocation2] sm:$0xff] %vm100, %v98
    %102 = vst.msk [vmem:[#allocation2 + $0x8] sm:$0xff] %vm100, %v99
    // Predicated region
    $region26: #{tpu_custom_call.1} parent=1 // pred_check
      %p103 = pneg %p48
    $region27: #{tpu_custom_call.1} parent=1 // pred_check_branch
      %105 = sbr.rel (%p103) target = $region29
    $region28: #{tpu_custom_call.1} parent=1 // pred_region
      %v106 = vld [vmem:[#allocation2] sm:$0xff]
      %v107 = vld [vmem:[#allocation2 + $0x8] sm:$0xff]
      %v108 = vld [vmem:[%s2] sm:$0x1]
      %v110 = vperm.slane %v108, 0
      %v112 = vadd.f32 %v106, %v110
      %v113 = vadd.f32 %v107, %v110
      %v114 = vpack.c.bf16 %v112, %v112
      %v115 = vpack.c.bf16 %v113, %v113
      %vm116 = vcmask 781312
      %117 = vst.msk [vmem:[#allocation8] sm:$0xf] %vm116, %v114
      %118 = vst.msk [vmem:[#allocation8 + $0x4] sm:$0xf] %vm116, %v115
    $region29: #{tpu_custom_call.1} parent=1 // pred_fallthru
      _
    // Predicated region
    $region30: #{tpu_custom_call.1} parent=1 // pred_check
      _
    $region31: #{tpu_custom_call.1} parent=1 // pred_check_branch
      %120 = sbr.rel (0) target = $region33
    $region32: #{tpu_custom_call.1} parent=1 // pred_region
      %122 = vsyncadd [#allocation5], 0
      %s123 = sshll.u32 [#allocation8], 4
      %s124 = int_to_ptr.vmem [resolvable:$true] %s123
      %s125 = sshll.u32 %s3, 4
      %s126 = int_to_ptr.hbm [resolvable:$true] %s125
      %131 = dma.vmem_to_hbm [thread:$0]  %s124, 128, %s126, [#allocation5], 64, 64, 4
    $region33: #{tpu_custom_call.1} parent=1 // pred_fallthru
      _
    // Predicated region
    $region34: #{tpu_custom_call.1} parent=1 // pred_check
      _
    $region35: #{tpu_custom_call.1} parent=1 // pred_check_branch
      %133 = sbr.rel (0) target = $region37
    $region36: #{tpu_custom_call.1} parent=1 // pred_region
      %135 = dma.done [#allocation5], 128
    $region37: #{tpu_custom_call.1} parent=1 // pred_fallthru
      _
    %136 = vsyncpa [#allocation4], 1
    %137 = vsyncpa [#allocation7], 1
    %138 = vsyncpa [#allocation5], 1

</llo_original>
